<compile_context>
chip_gen: v7x
topology: tpu7x:2x2x1
jax: 0.10.0
libtpu: 0.0.40
codegen_flags: <defaults>
</compile_context>

<pallas_src>
import numpy as np
import jax
import jax.numpy as jnp
from jax import lax
from jax.experimental import pallas as pl
from jax.experimental.pallas import tpu as pltpu


def _ceil128(n):
    return ((n + 127) // 128) * 128


# --------------------------------------------------------------------------- #
# Structural matrices (host-built, weight independent)
# --------------------------------------------------------------------------- #
def _pool_mat(n):
    """(n//2, n): averages consecutive pairs (x 0.5)."""
    m = np.zeros((n // 2, n), np.float32)
    for i in range(n // 2):
        m[i, 2 * i] = 0.5
        m[i, 2 * i + 1] = 0.5
    return m


def _shift_tensor(n, k):
    """(k, n, n): slice s is the shift-by-(s - k//2) matrix with zero fill."""
    p = k // 2
    t = np.zeros((k, n, n), np.float32)
    for s in range(k):
        off = s - p
        for i in range(n):
            j = i + off
            if 0 <= j < n:
                t[s, i, j] = 1.0
    return t


def _upsample_mat(m, n):
    """(m, n) 1-D linear interpolation matrix, align_corners=True semantics."""
    u = np.zeros((m, n), np.float32)
    if m == 1 or n == 1:
        u[:, 0] = 1.0
        return u
    for i in range(m):
        src = i * (n - 1) / (m - 1)
        j0 = int(np.floor(src))
        f = src - j0
        j1 = min(j0 + 1, n - 1)
        u[i, j0] += 1.0 - f
        u[i, j1] += f
    return u


def _pool_rhs(w_in, bt, l_in, l_out):
    """Right-operand column pool matrix (l_in, l_out): block-diag over bt
    lane-packed samples, zero-padded to the 128-multiple lane widths."""
    w_out = w_in // 2
    m = np.zeros((l_in, l_out), np.float32)
    for b in range(bt):
        for p_ in range(w_out):
            m[b * w_in + 2 * p_, b * w_out + p_] = 0.5
            m[b * w_in + 2 * p_ + 1, b * w_out + p_] = 0.5
    return m


def _ups_rhs(w_out, w_in, bt, l_in, l_out):
    """Right-operand column bilinear-upsample matrix (align_corners=True)."""
    u = _upsample_mat(w_out, w_in).T            # (w_in, w_out)
    m = np.zeros((l_in, l_out), np.float32)
    for b in range(bt):
        m[b * w_in:(b + 1) * w_in, b * w_out:(b + 1) * w_out] = u
    return m


# --------------------------------------------------------------------------- #
# Chip-aware batch-tile selection
# --------------------------------------------------------------------------- #
def _chip_info():
    try:
        kind = jax.devices()[0].device_kind.lower()
    except Exception:
        kind = ""
    two_core = ("v7" in kind) or ("7x" in kind)
    vmem_bytes = (64 if two_core else 128) << 20
    return (2 if two_core else 1), vmem_bytes


def _vmem_estimate(C, H, W, bt, out_bytes=2, cd_bytes=2):
    H2, H4, H8 = H // 2, H // 4, H // 8
    L1, L2 = _ceil128(bt * W), _ceil128(bt * W // 2)
    L3, L4 = _ceil128(bt * W // 4), _ceil128(bt * W // 8)
    const = (7 * H2 * C * H + L1 * L2 + L2 * L3 + L3 * L2 + L2 * L1) * cd_bytes
    const += (L3 * L4 + L4 * L3) * 4
    const += _ceil128(H2) * (7 * H2 + 5 * H4 + 5 * H4 + 3 * H8 + H2 + H) * cd_bytes
    const += _ceil128(max(H8, 8)) * (3 * H8 + H4) * 4
    io = 2 * (C * H * L1 * cd_bytes) + 2 * (H * L1 * out_bytes)   # double-buffered
    interm = 4 * (7 * H2 * L1 + (7 * H2 + 5 * H4) * L2 + H * L1 + H2 * L2 + H2 * L1)
    return const + io + interm


def _pick_bt(B, C, H, W, num_cores, vmem_budget):
    """Largest batch tile that (a) lets every TensorCore get a grid step,
    (b) keeps the dominant matmul lane width in [256, 512], (c) fits VMEM."""
    cands = [bt for bt in range(1, B + 1) if B % bt == 0]

    def pref(bt):
        g = B // bt
        return ((g % num_cores == 0) or (g >= num_cores),
                bt * W <= 512,
                bt * W >= 256,
                bt)

    for bt in sorted(cands, key=pref, reverse=True):
        if _vmem_estimate(C, H, W, bt) <= vmem_budget:
            return bt
    return 1


# --------------------------------------------------------------------------- #
# Roll-direction probe (cached): guarantees lane-shift sign matches jnp.roll
# --------------------------------------------------------------------------- #
_ROLL_IS_JNP = None


def _roll_matches_jnp():
    global _ROLL_IS_JNP
    if _ROLL_IS_JNP is None:
        def k(x_ref, o_ref):
            o_ref[...] = pltpu.roll(x_ref[...], shift=1, axis=1)

        x = jnp.tile(jnp.arange(128, dtype=jnp.float32)[None, :], (8, 1))
        y = pl.pallas_call(
            k, out_shape=jax.ShapeDtypeStruct((8, 128), jnp.float32))(x)
        # jnp.roll semantics: out[1] == in[0] == 0
        _ROLL_IS_JNP = bool(float(y[0, 1]) == 0.0)
    return _ROLL_IS_JNP


# --------------------------------------------------------------------------- #
# Pallas kernel
# --------------------------------------------------------------------------- #
def _build_kernel(C, H, W, lanes, offs_b, offs_f, cdt, roll_is_jnp):
    H2, H4, H8 = H // 2, H // 4, H // 8
    W2, W4, W8 = W // 2, W // 4, W // 8
    L1, L2, L3, L4 = lanes
    f32 = jnp.float32
    ob, of = offs_b, offs_f

    def mm(a, b):
        return jnp.dot(a, b, preferred_element_type=f32)

    def lane_cols(L, width):
        # within-sample column id of each packed lane
        return lax.broadcasted_iota(jnp.int32, (1, L), 1) % width

    def shift_sum(rows, nblk, rsz, width, cid, step=1):
        """sum_dx lane-shift(rows[dx*rsz:(dx+1)*rsz], (dx - nblk//2)*step) with
        zero fill at per-sample boundaries.  Shifts ride the XLU (pltpu.roll),
        masks/adds ride the VPU — no MXU work."""
        p = nblk // 2
        L = rows.shape[-1]
        acc = rows[p * rsz:(p + 1) * rsz, :]
        for dx in range(nblk):
            if dx == p:
                continue
            s = (dx - p) * step
            blk = rows[dx * rsz:(dx + 1) * rsz, :]
            amt = ((-s) % L) if roll_is_jnp else (s % L)
            rolled = pltpu.roll(blk, shift=amt, axis=1)
            mask = (cid + s >= 0) & (cid + s < width)
            acc = acc + jnp.where(mask, rolled, 0.0)
        return acc

    def kernel(bias_ref, x_ref, d1_ref, sb_ref, sf_ref,
               pw1_ref, pw2_ref, pw3_ref, u3w_ref, u2w_ref, u1w_ref, o_ref):
        cid1 = lane_cols(L1, W)
        cid2 = lane_cols(L2, W2)
        cid3 = lane_cols(L3, W4)
        cid4 = lane_cols(L4, W8)

        # ---- pyramid1: (H-pool + 7x7 row taps folded over C) is ONE matmul,
        #      then 6 lane rolls (pre-pool coords) + one W-pool matmul ---------
        r1 = mm(d1_ref[...], x_ref[...])                                  # (7*H2, L1)
        s1 = shift_sum(r1, 7, H2, W, cid1, step=2)
        x1 = jnp.maximum(mm(s1.astype(cdt), pw1_ref[...]) + bias_ref[0], 0.0)   # (H2, L2)

        # ---- conv1 (7x7) and pyramid2 row stages share one matmul ------------
        x1c = x1.astype(cdt)
        dc1p2 = sb_ref[ob["dc1p2"]:ob["dc1p2"] + 7 * H2 + 5 * H4, :H2]
        rc = mm(dc1p2, x1c)                                               # (7H2+5H4, L2)
        x1b = jnp.maximum(shift_sum(rc[:7 * H2], 7, H2, W2, cid2) + bias_ref[3], 0.0)
        s2 = shift_sum(rc[7 * H2:7 * H2 + 5 * H4], 5, H4, W2, cid2, step=2)
        x2 = jnp.maximum(mm(s2.astype(cdt), pw2_ref[...]) + bias_ref[1], 0.0)   # (H4, L3)

        # ---- conv2 (5x5) and pyramid3 row stages share one matmul ------------
        x2c = x2.astype(cdt)
        dc2p3 = sb_ref[ob["dc2p3"]:ob["dc2p3"] + 5 * H4 + 3 * H8, :H4]
        rc2 = mm(dc2p3, x2c)                                              # (5H4+3H8, L3)
        x2b = jnp.maximum(shift_sum(rc2[:5 * H4], 5, H4, W4, cid3) + bias_ref[4], 0.0)
        s3 = shift_sum(rc2[5 * H4:5 * H4 + 3 * H8], 3, H8, W4, cid3, step=2)
        # level 3 stays f32 end-to-end (no bf16 repacking of 8-row slices)
        x3 = jnp.maximum(mm(s3, pw3_ref[...]) + bias_ref[2], 0.0)         # (H8, L4)

        # ---- conv3 (3x3), f32 -------------------------------------------------
        dc3 = sf_ref[of["dc3"]:of["dc3"] + 3 * H8, :H8]
        rc3 = mm(dc3, x3)                                                 # (3*H8, L4)
        x3b = jnp.maximum(shift_sum(rc3, 3, H8, W8, cid4) + bias_ref[5], 0.0)

        # ---- bilinear (align_corners=True) upsample + merge + sigmoid --------
        u3h = sf_ref[of["u3h"]:of["u3h"] + H4, :H8]
        y = mm(u3h, mm(x3b, u3w_ref[...])) + x2b                          # (H4, L3) f32
        u2h = sb_ref[ob["u2h"]:ob["u2h"] + H2, :H4]
        y = mm(u2h, mm(y.astype(cdt), u2w_ref[...]).astype(cdt)) + x1b    # (H2, L2)
        u1h = sb_ref[ob["u1h"]:ob["u1h"] + H, :H2]
        y = mm(u1h, mm(y.astype(cdt), u1w_ref[...]).astype(cdt))          # (H,  L1)
        o_ref[...] = pl.reciprocal(1.0 + jnp.exp(-y), approx=True).astype(o_ref.dtype)

    return kernel


# --------------------------------------------------------------------------- #
# Host wrapper
# --------------------------------------------------------------------------- #
def _fold_conv_bn(p, eps):
    scale = p["gamma"][0] / jnp.sqrt(p["var"][0] + eps)
    w_folded = p["w"][0] * scale                      # (Cin, K, K)
    bias = p["beta"][0] - scale * p["mean"][0]
    return w_folded, bias


def spatial_attention_pallas(x, params, eps=1e-5, compute_dtype=jnp.bfloat16,
                             out_dtype=jnp.bfloat16):
    B, C, H, W = x.shape
    assert H % 8 == 0 and W % 8 == 0, "H and W must be divisible by 8"
    H2, H4, H8 = H // 2, H // 4, H // 8
    W2, W4, W8 = W // 2, W // 4, W // 8
    cd = compute_dtype

    num_cores, phys_vmem = _chip_info()
    vmem_limit = int(min(3 * phys_vmem // 4, 96 << 20))
    Bt = _pick_bt(B, C, H, W, num_cores, int(vmem_limit * 0.7))
    G = B // Bt
    N1, N2, N3, N4 = Bt * W, Bt * W2, Bt * W4, Bt * W8
    L1, L2, L3, L4 = map(_ceil128, (N1, N2, N3, N4))

    # ---- fold BN (inference / running stats) into conv weights ---------------
    w_p1, b_p1 = _fold_conv_bn(params["p1"], eps)
    w_p2, b_p2 = _fold_conv_bn(params["p2"], eps)
    w_p3, b_p3 = _fold_conv_bn(params["p3"], eps)
    w_c1, b_c1 = _fold_conv_bn(params["c1"], eps)
    w_c2, b_c2 = _fold_conv_bn(params["c2"], eps)
    w_c3, b_c3 = _fold_conv_bn(params["c3"], eps)
    biases = jnp.stack([b_p1, b_p2, b_p3, b_c1, b_c2, b_c3]).astype(jnp.float32)

    # ---- weight-folded row-side matrices (H-pool + row taps + weights) -------
    ph, ph2, ph3 = _pool_mat(H), _pool_mat(H2), _pool_mat(H4)
    s7r, s5r, s3r = _shift_tensor(H2, 7), _shift_tensor(H4, 5), _shift_tensor(H8, 3)
    a7 = np.einsum('dij,jh->dih', s7r, ph)
    a5 = np.einsum('dij,jh->dih', s5r, ph2)
    a3 = np.einsum('dij,jh->dih', s3r, ph3)

    d1 = jnp.einsum('cyx,yih->xich', w_p1, jnp.asarray(a7)).reshape(7 * H2, C * H)
    d2 = jnp.einsum('yx,yih->xih', w_p2[0], jnp.asarray(a5)).reshape(5 * H4, H2)
    d3 = jnp.einsum('yx,yih->xih', w_p3[0], jnp.asarray(a3)).reshape(3 * H8, H4)
    dc1 = jnp.einsum('yx,yih->xih', w_c1[0], jnp.asarray(s7r)).reshape(7 * H2, H2)
    dc2 = jnp.einsum('yx,yih->xih', w_c2[0], jnp.asarray(s5r)).reshape(5 * H4, H4)
    dc3 = jnp.einsum('yx,yih->xih', w_c3[0], jnp.asarray(s3r)).reshape(3 * H8, H8)
    dc1p2 = jnp.concatenate([dc1, d2], axis=0)        # (7*H2 + 5*H4, H2)
    dc2p3 = jnp.concatenate([dc2, d3], axis=0)        # (5*H4 + 3*H8, H4)

    # ---- lane-side constants: pool / upsample, block-diag over Bt, padded ----
    pw1 = jnp.asarray(_pool_rhs(W, Bt, L1, L2), cd)
    pw2 = jnp.asarray(_pool_rhs(W2, Bt, L2, L3), cd)
    pw3 = jnp.asarray(_pool_rhs(W4, Bt, L3, L4), jnp.float32)
    u3w = jnp.asarray(_ups_rhs(W4, W8, Bt, L4, L3), jnp.float32)
    u2w = jnp.asarray(_ups_rhs(W2, W4, Bt, L3, L2), cd)
    u1w = jnp.asarray(_ups_rhs(W, W2, Bt, L2, L1), cd)
    u3h = jnp.asarray(_upsample_mat(H4, H8), jnp.float32)
    u2h = jnp.asarray(_upsample_mat(H2, H4), jnp.float32)
    u1h = jnp.asarray(_upsample_mat(H, H2), jnp.float32)

    # ---- pack narrow (<128-lane) left operands into lane-dense slabs ---------
    def pack(mats, lanes, dtype):
        offs, chunks, r = {}, [], 0
        for name, m in mats:
            offs[name] = r
            chunks.append(jnp.pad(m, ((0, 0), (0, lanes - m.shape[1]))))
            r += m.shape[0]
        return jnp.concatenate(chunks, axis=0).astype(dtype), offs

    lanes_b = _ceil128(max(H2, H4, 8))
    lanes_f = _ceil128(max(H8, 8))
    slab_b, offs_b = pack([("dc1p2", dc1p2), ("dc2p3", dc2p3),
                           ("u2h", u2h), ("u1h", u1h)], lanes_b, cd)
    slab_f, offs_f = pack([("dc3", dc3), ("u3h", u3h)], lanes_f, jnp.float32)
    d1 = d1.astype(cd)

    # ---- pack the batch along lanes: (B,C,H,W) -> (G, C*H, L1) ---------------
    xt = (x.astype(cd).reshape(G, Bt, C, H, W)
            .transpose(0, 2, 3, 1, 4).reshape(G, C * H, N1))
    if L1 > N1:
        xt = jnp.pad(xt, ((0, 0), (0, 0), (0, L1 - N1)))

    kernel = _build_kernel(C, H, W, (L1, L2, L3, L4), offs_b, offs_f, cd,
                           _roll_matches_jnp())

    # constants are grid-invariant (index_map always (0,0)) -> fetched once.
    consts = [d1, slab_b, slab_f, pw1, pw2, pw3, u3w, u2w, u1w]
    in_specs = ([pl.BlockSpec(memory_space=pltpu.MemorySpace.SMEM),          # biases
                 pl.BlockSpec((None, C * H, L1), lambda g: (g, 0, 0))]       # x tile
                + [pl.BlockSpec(m.shape, lambda g: (0, 0)) for m in consts])
    out_spec = pl.BlockSpec((None, H, L1), lambda g: (g, 0, 0))

    out = pl.pallas_call(
        kernel,
        out_shape=jax.ShapeDtypeStruct((G, H, L1), out_dtype),
        grid=(G,),
        in_specs=in_specs,
        out_specs=out_spec,
        compiler_params=pltpu.CompilerParams(
            dimension_semantics=("parallel",),
            vmem_limit_bytes=vmem_limit),
    )(biases, xt, *consts)

    out = (out[..., :N1].reshape(G, H, Bt, W)
              .transpose(0, 2, 1, 3).reshape(B, 1, H, W))
    return out


# --------------------------------------------------------------------------- #
# Pure-JAX reference (for correctness check)
# --------------------------------------------------------------------------- #
def _conv_bn_relu_ref(x, p, eps, pad):
    y = lax.conv_general_dilated(
        x, p["w"], window_strides=(1, 1), padding=[(pad, pad), (pad, pad)],
        dimension_numbers=("NCHW", "OIHW", "NCHW"))
    scale = p["gamma"] / jnp.sqrt(p["var"] + eps)
    shift = p["beta"] - scale * p["mean"]
    y = y * scale.reshape(1, -1, 1, 1) + shift.reshape(1, -1, 1, 1)
    return jnp.maximum(y, 0.0)


def _avgpool2_ref(x):
    B, Cc, H, W = x.shape
    return x.reshape(B, Cc, H // 2, 2, W // 2, 2).mean(axis=(3, 5))


def _upsample_bilinear_ac_ref(x, oh, ow):
    B, Cc, H, W = x.shape

    def coords(o, n):
        if o == 1 or n == 1:
            z = jnp.zeros((o,), jnp.int32)
            return z, z, jnp.zeros((o,), jnp.float32)
        src = jnp.arange(o, dtype=jnp.float32) * ((n - 1) / (o - 1))
        i0 = jnp.floor(src).astype(jnp.int32)
        i1 = jnp.minimum(i0 + 1, n - 1)
        return i0, i1, src - i0.astype(jnp.float32)

    i0, i1, fh = coords(oh, H)
    j0, j1, fw = coords(ow, W)
    rows = (x[:, :, i0, :] * (1.0 - fh)[None, None, :, None]
            + x[:, :, i1, :] * fh[None, None, :, None])
    return (rows[:, :, :, j0] * (1.0 - fw)[None, None, None, :]
            + rows[:, :, :, j1] * fw[None, None, None, :])


def spatial_attention_reference(x, params, eps=1e-5):
    h, w = x.shape[2], x.shape[3]
    x1 = _conv_bn_relu_ref(_avgpool2_ref(x), params["p1"], eps, 3)
    x2 = _conv_bn_relu_ref(_avgpool2_ref(x1), params["p2"], eps, 2)
    x3 = _conv_bn_relu_ref(_avgpool2_ref(x2), params["p3"], eps, 1)
    x1 = _conv_bn_relu_ref(x1, params["c1"], eps, 3)
    x2 = _conv_bn_relu_ref(x2, params["c2"], eps, 2)
    x3 = _conv_bn_relu_ref(x3, params["c3"], eps, 1)
    x3 = _upsample_bilinear_ac_ref(x3, h // 4, w // 4)
    y = x3 + x2
    y = _upsample_bilinear_ac_ref(y, h // 2, w // 2)
    y = y + x1
    y = _upsample_bilinear_ac_ref(y, h, w)
    return jax.nn.sigmoid(y)


# --------------------------------------------------------------------------- #
# Deterministic parameter init + driver
# --------------------------------------------------------------------------- #
def _init_conv_bn(key, in_ch, k):
    k1, k2, k3, k4, k5 = jax.random.split(key, 5)
    fan_in = in_ch * k * k
    return {
        "w": jax.random.normal(k1, (1, in_ch, k, k), jnp.float32) / np.sqrt(fan_in),
        "gamma": jax.random.uniform(k2, (1,), jnp.float32, 0.5, 1.5),
        "beta": 0.1 * jax.random.normal(k3, (1,), jnp.float32),
        "mean": 0.1 * jax.random.normal(k4, (1,), jnp.float32),
        "var": jax.random.uniform(k5, (1,), jnp.float32, 0.5, 1.5),
    }


if __name__ == "__main__":
    B, C, H, W = 16, 4, 64, 64
    key = jax.random.PRNGKey(0)
    kx, kp = jax.random.split(key)
    x = jax.random.normal(kx, (B, C, H, W), jnp.float32)

    kk = jax.random.split(kp, 6)
    params = {
        "p1": _init_conv_bn(kk[0], C, 7),
        "p2": _init_conv_bn(kk[1], 1, 5),
        "p3": _init_conv_bn(kk[2], 1, 3),
        "c1": _init_conv_bn(kk[3], 1, 7),
        "c2": _init_conv_bn(kk[4], 1, 5),
        "c3": _init_conv_bn(kk[5], 1, 3),
    }

    out = spatial_attention_pallas(x, params)
    out = jax.block_until_ready(out)

    ref = spatial_attention_reference(x, params)
    np.testing.assert_allclose(np.asarray(out.astype(jnp.float32)),
                               np.asarray(ref), rtol=2e-2, atol=2e-2)
    print("KERNEL_OK")
</pallas_src>

<mosaic_0001>
module attributes {stable_mosaic.version = 11 : i64} {
  func.func @k(%arg0: memref<8x128xf32, #tpu.memory_space<vmem>>, %arg1: memref<8x128xf32, #tpu.memory_space<vmem>>) attributes {dimension_semantics = [], scalar_prefetch = 0 : i64, scratch_operands = 0 : i64, tpu.core_type = #tpu.core_type<tc>} {
    %c0 = arith.constant 0 : index
    %c0_0 = arith.constant 0 : index
    %0 = vector.load %arg0[%c0, %c0_0] : memref<8x128xf32, #tpu.memory_space<vmem>>, vector<8x128xf32>
    %c1_i32 = arith.constant 1 : i32
    %1 = tpu.dynamic_rotate %0 by %c1_i32 dim 1 : vector<8x128xf32>, i32 -> vector<8x128xf32>
    %c0_1 = arith.constant 0 : index
    %c0_2 = arith.constant 0 : index
    %2 = vector.load %arg1[%c0_1, %c0_2] : memref<8x128xf32, #tpu.memory_space<vmem>>, vector<8x128xf32>
    tpu.vector_store %arg1[%c0_1, %c0_2], %1 {strides = array<i32>} : memref<8x128xf32, #tpu.memory_space<vmem>>, vector<8x128xf32>,
    return
  }
}

</mosaic_0001>

<llo_original>
// kernel: tpu_custom_call.1
$region0: #{tpu_custom_call.1}
  #allocation0 [shape = 'u32[]', space=smem, size = 0x4, offset = 0x4, fixed_abs, tag = 'smem constant byte address 0x4 - core index']
  #allocation1 [shape = 'u32[144,128]{1,0:T(1,128)}', space=vmem, size = 0x12000, scoped, tag = 'internal scratch']
  %s0 = inlined_call_operand.hbm [shape: f32[8,128], index: 0, kind: input, shape index: {}]
  %s1 = inlined_call_operand.hbm [shape: f32[8,128], index: 1, kind: output, shape index: {}]
  %s2 = sld [smem:[#allocation0]]
  $region18: #{tpu_custom_call.1} parent=0
    _
  %s4 = ssub.s32 1, %s2
  %s5 = scalar_select 0, %s4, %s2
  $region1: #{tpu_custom_call.1} parent=0
    #allocation2 [shape = 'u8[4096]{0}', space=vmem, size = 0x1000, scoped, tag = 'input window, operand 0, single buffered']
    #allocation3 [shape = 's32[1]{0}', space=sflag, size = 0x4, scoped, tag = 'scoped memory for tpu_custom_call.1']
    #allocation4 [shape = 's32[1]{0}', space=sflag, size = 0x4, scoped, tag = 'scoped memory for tpu_custom_call.1']
    #allocation5 [shape = 'u8[4096]{0}', space=vmem, size = 0x1000, scoped, tag = 'output window, operand 0, single buffered']
    %6 = vsyncpa [#allocation3], 0
    %7 = vsyncpa [#allocation4], 0
    // Predicated region
    $region2: #{tpu_custom_call.1} parent=1 // pred_check
      _
    $region3: #{tpu_custom_call.1} parent=1 // pred_check_branch
      %9 = sbr.rel (0) target = $region5
    $region4: #{tpu_custom_call.1} parent=1 // pred_region
      %s11 = ssub.s32 128, 128
      %12 = vsyncadd [#allocation3], %s11
      %s14 = sshll.u32 [#allocation2], 4
      %s15 = int_to_ptr.vmem [resolvable:$true] %s14
      %17 = dma.hbm_to_vmem [thread:$0]  %s0, 128, %s15, [#allocation3]
    $region5: #{tpu_custom_call.1} parent=1 // pred_fallthru
      _
    // Predicated region
    $region6: #{tpu_custom_call.1} parent=1 // pred_check
      _
    $region7: #{tpu_custom_call.1} parent=1 // pred_check_branch
      %19 = sbr.rel (0) target = $region9
    $region8: #{tpu_custom_call.1} parent=1 // pred_region
      %20 = dma.done [#allocation3], 128
    $region9: #{tpu_custom_call.1} parent=1 // pred_fallthru
      _
    %v21 = vld [vmem:[#allocation2] sm:$0xff]
    %22 = vrot.lane.b32.xlu0 %v21, 1
    %v23 = vpop.permute.xlu0 %22
    %24 = vst [vmem:[#allocation5] sm:$0xff] %v23
    // Predicated region
    $region10: #{tpu_custom_call.1} parent=1 // pred_check
      _
    $region11: #{tpu_custom_call.1} parent=1 // pred_check_branch
      %26 = sbr.rel (0) target = $region13
    $region12: #{tpu_custom_call.1} parent=1 // pred_region
      %s28 = ssub.s32 128, 128
      %29 = vsyncadd [#allocation4], %s28
      %s31 = sshll.u32 [#allocation5], 4
      %s32 = int_to_ptr.vmem [resolvable:$true] %s31
      %34 = dma.vmem_to_hbm [thread:$0]  %s32, 128, %s1, [#allocation4]
    $region13: #{tpu_custom_call.1} parent=1 // pred_fallthru
      _
    // Predicated region
    $region14: #{tpu_custom_call.1} parent=1 // pred_check
      _
    $region15: #{tpu_custom_call.1} parent=1 // pred_check_branch
      %36 = sbr.rel (0) target = $region17
    $region16: #{tpu_custom_call.1} parent=1 // pred_region
      %37 = dma.done [#allocation4], 128
    $region17: #{tpu_custom_call.1} parent=1 // pred_fallthru
      _
    %38 = vsyncpa [#allocation3], 1
    %39 = vsyncpa [#allocation4], 1

</llo_original>
